<compile_context>
chip_gen: v6e
topology: v6e:2x2x1
jax: 0.10.0
libtpu: 0.0.40
codegen_flags: <defaults>
</compile_context>

<pallas_src>
from abc import ABC, abstractmethod

import jax
import jax.numpy as jnp
from jax.experimental import pallas as pl
from jax.experimental.pallas import tpu as pltpu

_LANE = 128
# 2048 rows x 128 lanes x 4 B (f32) = 1 MiB per input buffer; with
# double-buffering that is 2 MiB — safe on v5e/v6e (128 MiB VMEM) and
# v7x (64 MiB VMEM), while keeping grid-step overhead amortized.
_MAX_BLOCK_ROWS = 2048


def _partial_sum_kernel(x_ref, o_ref):
    # Reduce this step's (block_rows, 128) tile to one f32 partial sum and
    # write it to this step's private SMEM slot.  No cross-iteration
    # dependency -> the grid axis is fully parallel.
    o_ref[0, 0] = jnp.sum(x_ref[...].astype(jnp.float32))


def pallas_mean_metric(x: jax.Array) -> jax.Array:
    """Global-mean 'metric' over a tensor; the reduction runs in Pallas."""
    total = int(x.size)

    # Lane-dense tiling: flatten everything and view as [rows, 128].
    rows_needed = int(pl.cdiv(total, _LANE))
    if rows_needed <= _MAX_BLOCK_ROWS:
        block_rows = max(rows_needed, 1)   # full-extent block, grid=(1,)
        n_blocks = 1
    else:
        block_rows = _MAX_BLOCK_ROWS       # multiple of 8 -> legal sublane tiling
        n_blocks = int(pl.cdiv(rows_needed, block_rows))

    padded_total = n_blocks * block_rows * _LANE
    flat = x.reshape(-1)
    pad = padded_total - total
    if pad:
        # Only taken for misaligned sizes (not the demo shape).  Zeros do not
        # change the sum; the divisor below uses the true element count.
        flat = jnp.pad(flat, (0, pad))
    x2d = flat.reshape(n_blocks * block_rows, _LANE)

    partials = pl.pallas_call(
        _partial_sum_kernel,
        out_shape=jax.ShapeDtypeStruct((n_blocks, 1), jnp.float32),
        grid_spec=pltpu.PrefetchScalarGridSpec(
            num_scalar_prefetch=0,
            grid=(n_blocks,),
            in_specs=[
                # Lane axis is a full 128 wide; sublane axis is either a
                # multiple of 8 (2048) or the full row extent -> legal tiling.
                pl.BlockSpec((block_rows, _LANE), lambda i: (i, 0)),
            ],
            out_specs=pl.BlockSpec(
                (1, 1), lambda i: (i, 0), memory_space=pltpu.SMEM
            ),
        ),
        compiler_params=pltpu.CompilerParams(
            # Independent partial sums -> parallel (megacore-shardable on v7x).
            dimension_semantics=("parallel",),
        ),
    )(x2d)

    # Tiny final combine (n_blocks scalars) done in plain JAX.
    return jnp.sum(partials[:, 0]) / jnp.float32(total)


class BaseMetricAdapter(ABC):
    """JAX/Pallas mirror of the abstract PyTorch adapter."""

    # TODO(synk): nn.Module parameter/buffer registration has no Pallas
    # equivalent; the adapter holds no parameters, so only the dispatch
    # contract is mirrored.

    def __init__(self, metric):
        self.metric = metric

    @abstractmethod
    def forward(self, x):
        ...

    def __call__(self, x):
        return self.forward(x)

    @staticmethod
    @abstractmethod
    def is_suitable_input(metric) -> bool:
        ...


class PallasMetricAdapter(BaseMetricAdapter):
    """Concrete adapter: forward dispatches to the wrapped Pallas metric."""

    def forward(self, x):
        return self.metric(x)

    @staticmethod
    def is_suitable_input(metric) -> bool:
        return callable(metric)


if __name__ == "__main__":
    key = jax.random.PRNGKey(0)
    # Small NCHW input consistent with typical metric inputs.
    x = jax.random.normal(key, (2, 4, 16, 16), dtype=jnp.float32)

    adapter = PallasMetricAdapter(pallas_mean_metric)
    assert PallasMetricAdapter.is_suitable_input(pallas_mean_metric)

    result = adapter(x)
    result = jax.block_until_ready(result)

    # Cross-check against plain JAX.
    ref = jnp.mean(x)
    assert jnp.allclose(result, ref, atol=1e-5, rtol=1e-5), (result, ref)

    print("KERNEL_OK")
</pallas_src>

<mosaic_0001>
module attributes {stable_mosaic.version = 11 : i64} {
  func.func @_partial_sum_kernel(%arg0: i32, %arg1: memref<16x128xf32, #tpu.memory_space<vmem>>, %arg2: memref<1x1xf32, #tpu.memory_space<smem>>) attributes {dimension_semantics = [#tpu.dimension_semantics<parallel>], iteration_bounds = array<i64: 1>, scalar_prefetch = 0 : i64, scratch_operands = 0 : i64, tpu.core_type = #tpu.core_type<tc>, window_params = [{transform_indices = @transform_0, window_bounds = array<i64: 16, 128>}, {transform_indices = @transform_1, window_bounds = array<i64: 1, 1>}]} {
    %c0 = arith.constant 0 : index
    %c0_0 = arith.constant 0 : index
    %0 = vector.load %arg1[%c0, %c0_0] : memref<16x128xf32, #tpu.memory_space<vmem>>, vector<16x128xf32>
    %1 = vector.shape_cast %0 : vector<16x128xf32> to vector<1x16x128xf32>
    %cst = arith.constant dense<0.000000e+00> : vector<1xf32>
    %2 = vector.multi_reduction <add>, %1, %cst [1, 2] : vector<1x16x128xf32> to vector<1xf32>
    %3 = vector.shape_cast %2 : vector<1xf32> to vector<1x1x1xf32>
    %4 = vector.extract %3[0, 0, 0] : f32 from vector<1x1x1xf32>
    %c0_1 = arith.constant 0 : index
    %c0_2 = arith.constant 0 : index
    %5 = memref.load %arg2[%c0_1, %c0_2] : memref<1x1xf32, #tpu.memory_space<smem>>
    memref.store %4, %arg2[%c0_1, %c0_2] : memref<1x1xf32, #tpu.memory_space<smem>>
    return
  }
  func.func @transform_0(%arg0: i32) -> (i32, i32) {
    %c0_i32 = arith.constant 0 : i32
    %c0_i32_0 = arith.constant 0 : i32
    return %arg0, %c0_i32 : i32, i32
  }
  func.func @transform_1(%arg0: i32) -> (i32, i32) {
    %c0_i32 = arith.constant 0 : i32
    %c0_i32_0 = arith.constant 0 : i32
    return %arg0, %c0_i32 : i32, i32
  }
}

</mosaic_0001>

<llo_original>
// kernel: tpu_custom_call.1
$region0: #{tpu_custom_call.1}
  #allocation0 [shape = 'u32[]', space=smem, size = 0x4, offset = 0x4, fixed_abs, tag = 'smem constant byte address 0x4 - core index']
  #allocation1 [shape = 'u32[144,128]{1,0:T(1,128)}', space=vmem, size = 0x12000, scoped, tag = 'internal scratch']
  %s0 = inlined_call_operand.hbm [shape: f32[16,128], index: 0, kind: input, shape index: {}]
  %s1 = inlined_call_operand.hbm [shape: f32[1,1], index: 1, kind: output, shape index: {}]
  %s2 = sld [smem:[#allocation0]]
  $region18: #{tpu_custom_call.1} parent=0
    _
  %s4 = ssub.s32 1, %s2
  %s5 = scalar_select 0, %s4, %s2
  $region1: #{tpu_custom_call.1} parent=0
    #allocation2 [shape = 'u8[8192]{0}', space=vmem, size = 0x2000, scoped, tag = 'input window, operand 0, single buffered']
    #allocation3 [shape = 's32[1]{0}', space=sflag, size = 0x4, scoped, tag = 'scoped memory for tpu_custom_call.1']
    #allocation4 [shape = 's32[1]{0}', space=sflag, size = 0x4, scoped, tag = 'scoped memory for tpu_custom_call.1']
    #allocation5 [shape = 'u8[512]{0}', space=smem, size = 0x200, scoped, tag = 'output window, operand 0, single buffered']
    %6 = vsyncpa [#allocation3], 0
    %7 = vsyncpa [#allocation4], 0
    // Predicated region
    $region2: #{tpu_custom_call.1} parent=1 // pred_check
      _
    $region3: #{tpu_custom_call.1} parent=1 // pred_check_branch
      %9 = sbr.rel (0) target = $region5
    $region4: #{tpu_custom_call.1} parent=1 // pred_region
      %s11 = ssub.s32 256, 256
      %12 = vsyncadd [#allocation3], %s11
      %s13 = sshll.u32 [#allocation2], 4
      %s14 = int_to_ptr.vmem [resolvable:$true] %s13
      %19 = dma.hbm_to_vmem [thread:$0]  %s0, 256, %s14, [#allocation3], 128, 128, 8
    $region5: #{tpu_custom_call.1} parent=1 // pred_fallthru
      _
    // Predicated region
    $region6: #{tpu_custom_call.1} parent=1 // pred_check
      _
    $region7: #{tpu_custom_call.1} parent=1 // pred_check_branch
      %21 = sbr.rel (0) target = $region9
    $region8: #{tpu_custom_call.1} parent=1 // pred_region
      %22 = dma.done [#allocation3], 256
    $region9: #{tpu_custom_call.1} parent=1 // pred_fallthru
      _
    %v23 = vld [vmem:[#allocation2] sm:$0xff]
    %v24 = vld [vmem:[#allocation2 + $0x8] sm:$0xff]
    %v25 = vadd.f32 %v23, %v24
    %26 = vadd.xlane.f32.xlu0 %v25
    %v27 = vpop.xlane.xlu0 %26
    %v28 = vrot.slane %v27, 4
    %v29 = vadd.f32 %v27, %v28
    %v30 = vrot.slane %v29, 2
    %v31 = vadd.f32 %v29, %v30
    %v32 = vrot.slane %v31, 1
    %v33 = vadd.f32 %v31, %v32
    %s34 = vtos %v33
    %s35 = scalar_lea.smem [#allocation5], 0
    %36 = sst [smem:[%s35]] %s34
    // Predicated region
    $region10: #{tpu_custom_call.1} parent=1 // pred_check
      _
    $region11: #{tpu_custom_call.1} parent=1 // pred_check_branch
      %38 = sbr.rel (0) target = $region13
    $region12: #{tpu_custom_call.1} parent=1 // pred_region
      %s40 = ssub.s32 16, 16
      %41 = vsyncadd [#allocation4], %s40
      %44 = dma.smem_to_hbm [#allocation5], 16, %s1, [#allocation4]
    $region13: #{tpu_custom_call.1} parent=1 // pred_fallthru
      _
    // Predicated region
    $region14: #{tpu_custom_call.1} parent=1 // pred_check
      _
    $region15: #{tpu_custom_call.1} parent=1 // pred_check_branch
      %46 = sbr.rel (0) target = $region17
    $region16: #{tpu_custom_call.1} parent=1 // pred_region
      %47 = dma.done [#allocation4], 16
    $region17: #{tpu_custom_call.1} parent=1 // pred_fallthru
      _
    %48 = sfence
    %49 = vsyncpa [#allocation3], 1
    %50 = vsyncpa [#allocation4], 1

</llo_original>
